<compile_context>
chip_gen: v7x
topology: tpu7x:2x2x1
jax: 0.10.0
libtpu: 0.0.40
codegen_flags: <defaults>
</compile_context>

<pallas_src>
import jax
import jax.numpy as jnp
from jax import lax
from jax.experimental import pallas as pl
from jax.experimental.pallas import tpu as pltpu


def _maxpool2x2_kernel(x_ref, o_ref):
    # x_ref block: (TC, TH, 2*W) -- lanes [0, W) = input row 2r, lanes [W, 2W) = row 2r+1
    # o_ref block: (TC, TH, WO)  -- WO = W // 2 (odd W: last input column is ignored)
    tc, th, w2 = x_ref.shape
    w = w2 // 2
    wo = o_ref.shape[-1]

    # 1) H-pair reduction: two contiguous (unit-stride) lane windows + one elementwise max.
    top = x_ref[:, :, pl.ds(0, w)]              # (TC, TH, W)  == input rows 2r
    bot = x_ref[:, :, pl.ds(w, w)]              # (TC, TH, W)  == input rows 2r+1
    rowmax = jnp.maximum(top, bot)              # (TC, TH, W)

    # 2) W-pair reduction: even/odd lane gather (leading-dims-only reshape keeps the minor
    #    dim intact), then one elementwise max.
    r2 = rowmax.reshape(tc * th, w)
    idx = lax.broadcasted_iota(jnp.int32, (tc * th, wo), 1) * 2
    even = jnp.take_along_axis(r2, idx, axis=1)
    odd = jnp.take_along_axis(r2, idx + 1, axis=1)
    o_ref[...] = jnp.maximum(even, odd).reshape(tc, th, wo)


def _round_up(v, m):
    return -(-v // m) * m


def _plan_tiles(nc, ho, w, wo, itemsize, budget_bytes=3 << 20):
    """Pick (TC, TH) blocks for the (nc, ho, 2*w) input view.

    `budget_bytes` bounds the padded (input + output) VMEM footprint of one block; with
    double buffering plus in-kernel temporaries this stays well inside the 32 MiB scoped
    VMEM limit requested below (v7x has only 64 MiB physical VMEM per TensorCore).
    """
    sub = max(8, (8 * 4) // max(1, itemsize))   # sublane tile: f32 -> 8, bf16 -> 16, int8 -> 32
    lane = 128

    def row_bytes(th):  # padded VMEM bytes (input + output block) per nc-row
        in_b = _round_up(th, sub) * _round_up(2 * w, lane) * itemsize
        out_b = _round_up(th, sub) * _round_up(wo, lane) * itemsize
        return in_b + out_b

    # Output rows per block: the full image if it fits, else the largest multiple of `sub`
    # within budget (keeps the (8,128) tiling rule for the block's second-minor dim).
    if ho <= sub or row_bytes(ho) <= budget_bytes:
        th = ho
    else:
        per_sub = row_bytes(sub)
        th = max(sub, min((ho // sub) * sub, (budget_bytes // per_sub) * sub))

    tc = max(1, budget_bytes // row_bytes(th))
    if th == ho and nc >= 2:
        # Keep >= 2 grid steps along a "parallel" axis so the v7x megacore can shard them.
        tc = min(tc, -(-nc // 2))
    tc = min(tc, nc)
    return tc, th


def maxpool2x2_nchw(x):
    """nn.MaxPool2d(kernel_size=2, stride=2, dilation=1, ceil_mode=False) on an NCHW tensor."""
    n, c, h, w = x.shape
    ho, wo = h // 2, w // 2
    if ho == 0 or wo == 0:
        raise ValueError("pooled output would be empty")

    nc = n * c
    if h % 2:
        # PyTorch ceil_mode=False floors: the last input row never contributes.  Odd H needs
        # this one wrapper slice because the free (nc, ho, 2*w) view requires an even row
        # count; odd W is handled inside the kernel for free.
        x = x[:, :, : 2 * ho, :]
    x2 = x.reshape(nc, ho, 2 * w)               # free reshape: rows 2r, 2r+1 lane-concatenated

    tc, th = _plan_tiles(nc, ho, w, wo, x.dtype.itemsize)
    grid = (pl.cdiv(nc, tc), pl.cdiv(ho, th))

    y = pl.pallas_call(
        _maxpool2x2_kernel,
        out_shape=jax.ShapeDtypeStruct((nc, ho, wo), x.dtype),
        grid=grid,
        in_specs=[pl.BlockSpec((tc, th, 2 * w), lambda i, j: (i, j, 0))],
        out_specs=pl.BlockSpec((tc, th, wo), lambda i, j: (i, j, 0)),
        compiler_params=pltpu.CompilerParams(
            dimension_semantics=("parallel", "parallel"),
            vmem_limit_bytes=32 * 1024 * 1024),
    )(x2)
    return y.reshape(n, c, ho, wo)


class DownSampleBlock:
    """JAX/Pallas port of classifier_models.net_minist.DownSampleBlock."""

    def __init__(self, ker_size=(2, 2), stride=2, dilation=(1, 1),
                 ceil_mode=False, p=0.0):
        assert tuple(ker_size) == (2, 2) and stride == 2
        assert tuple(dilation) == (1, 1) and not ceil_mode
        if p:
            # TODO(synk): dropout branch (p > 0) not implemented; the reference module's
            # default p=0.0 never constructs nn.Dropout, so forward() is exactly the max-pool.
            raise NotImplementedError("Pallas DownSampleBlock only supports p=0.0")
        self.p = p

    def __call__(self, x_nchw):
        return maxpool2x2_nchw(x_nchw)


if __name__ == "__main__":
    key = jax.random.PRNGKey(0)
    # Matches the PyTorch NCHW input convention: (N, C, H, W)
    x = jax.random.normal(key, (2, 4, 16, 16), dtype=jnp.float32)

    block = DownSampleBlock()
    y = jax.block_until_ready(block(x))

    # Pure-JAX reference for MaxPool2d(2, stride=2) on NCHW.
    n, c, h, w = x.shape
    ref = jnp.max(x.reshape(n, c, h // 2, 2, w // 2, 2), axis=(3, 5))
    assert y.shape == (2, 4, 8, 8), y.shape
    assert y.dtype == x.dtype
    assert jnp.array_equal(y, ref), "mismatch vs reference max-pool (even dims)"

    # Odd spatial dims: PyTorch ceil_mode=False silently drops the last row/col.
    # (nc=3 here also exercises the non-divisor / masked partial-block path.)
    x_odd = jax.random.normal(jax.random.PRNGKey(1), (1, 3, 9, 7), dtype=jnp.float32)
    y_odd = jax.block_until_ready(block(x_odd))
    ref_odd = jnp.max(x_odd[:, :, :8, :6].reshape(1, 3, 4, 2, 3, 2), axis=(3, 5))
    assert y_odd.shape == (1, 3, 4, 3), y_odd.shape
    assert jnp.array_equal(y_odd, ref_odd), "mismatch vs reference max-pool (odd dims)"

    print("KERNEL_OK")
</pallas_src>

<mosaic_0001>
module attributes {stable_mosaic.version = 11 : i64} {
  func.func @_maxpool2x2_kernel(%arg0: i32, %arg1: i32, %arg2: memref<4x8x32xf32, #tpu.memory_space<vmem>>, %arg3: memref<4x8x8xf32, #tpu.memory_space<vmem>>) attributes {dimension_semantics = [#tpu.dimension_semantics<parallel>, #tpu.dimension_semantics<parallel>], iteration_bounds = array<i64: 2, 1>, scalar_prefetch = 0 : i64, scratch_operands = 0 : i64, tpu.core_type = #tpu.core_type<tc>, window_params = [{transform_indices = @transform_0, window_bounds = array<i64: 4, 8, 32>}, {transform_indices = @transform_1, window_bounds = array<i64: 4, 8, 8>}]} {
    %c0 = arith.constant 0 : index
    %c0_0 = arith.constant 0 : index
    %c0_1 = arith.constant 0 : index
    %0 = vector.load %arg2[%c0, %c0_0, %c0_1] : memref<4x8x32xf32, #tpu.memory_space<vmem>>, vector<4x8x16xf32>
    %c0_2 = arith.constant 0 : index
    %c0_3 = arith.constant 0 : index
    %c16 = arith.constant 16 : index
    %1 = vector.load %arg2[%c0_2, %c0_3, %c16] : memref<4x8x32xf32, #tpu.memory_space<vmem>>, vector<4x8x16xf32>
    %2 = arith.maximumf %0, %1 : vector<4x8x16xf32>
    %3 = vector.shape_cast %2 : vector<4x8x16xf32> to vector<32x16xf32>
    %4 = tpu.iota {dimensions = array<i32: 1>} : vector<32x8xi32>
    %c2_i32 = arith.constant 2 : i32
    %5 = vector.broadcast %c2_i32 : i32 to vector<32x8xi32>
    %6 = arith.muli %4, %5 : vector<32x8xi32>
    %c0_i32 = arith.constant 0 : i32
    %7 = vector.broadcast %c0_i32 : i32 to vector<32x8xi32>
    %8 = arith.cmpi slt, %6, %7 : vector<32x8xi32>
    %c16_i32 = arith.constant 16 : i32
    %9 = vector.broadcast %c16_i32 : i32 to vector<32x8xi32>
    %10 = arith.addi %6, %9 : vector<32x8xi32>
    %11 = arith.select %8, %10, %6 : vector<32x8xi1>, vector<32x8xi32>
    %12 = vector.shape_cast %11 : vector<32x8xi32> to vector<32x8x1xi32>
    %13 = vector.shape_cast %12 : vector<32x8x1xi32> to vector<32x8xi32>
    %14 = tpu.dynamic_gather %3[%13] in [1] : vector<32x16xf32>, vector<32x8xi32> -> vector<32x8xf32>
    %c1_i32 = arith.constant 1 : i32
    %15 = vector.broadcast %c1_i32 : i32 to vector<32x8xi32>
    %16 = arith.addi %6, %15 : vector<32x8xi32>
    %c0_i32_4 = arith.constant 0 : i32
    %17 = vector.broadcast %c0_i32_4 : i32 to vector<32x8xi32>
    %18 = arith.cmpi slt, %16, %17 : vector<32x8xi32>
    %c16_i32_5 = arith.constant 16 : i32
    %19 = vector.broadcast %c16_i32_5 : i32 to vector<32x8xi32>
    %20 = arith.addi %16, %19 : vector<32x8xi32>
    %21 = arith.select %18, %20, %16 : vector<32x8xi1>, vector<32x8xi32>
    %22 = vector.shape_cast %21 : vector<32x8xi32> to vector<32x8x1xi32>
    %23 = vector.shape_cast %22 : vector<32x8x1xi32> to vector<32x8xi32>
    %24 = tpu.dynamic_gather %3[%23] in [1] : vector<32x16xf32>, vector<32x8xi32> -> vector<32x8xf32>
    %25 = arith.maximumf %14, %24 : vector<32x8xf32>
    %26 = vector.shape_cast %25 : vector<32x8xf32> to vector<4x8x8xf32>
    %c0_6 = arith.constant 0 : index
    %c0_7 = arith.constant 0 : index
    %c0_8 = arith.constant 0 : index
    %27 = vector.load %arg3[%c0_6, %c0_7, %c0_8] : memref<4x8x8xf32, #tpu.memory_space<vmem>>, vector<4x8x8xf32>
    tpu.vector_store %arg3[%c0_6, %c0_7, %c0_8], %26 {strides = array<i32>} : memref<4x8x8xf32, #tpu.memory_space<vmem>>, vector<4x8x8xf32>,
    return
  }
  func.func @transform_0(%arg0: i32, %arg1: i32) -> (i32, i32, i32) {
    %c0_i32 = arith.constant 0 : i32
    %c0_i32_0 = arith.constant 0 : i32
    return %arg0, %arg1, %c0_i32 : i32, i32, i32
  }
  func.func @transform_1(%arg0: i32, %arg1: i32) -> (i32, i32, i32) {
    %c0_i32 = arith.constant 0 : i32
    %c0_i32_0 = arith.constant 0 : i32
    return %arg0, %arg1, %c0_i32 : i32, i32, i32
  }
}

</mosaic_0001>

<llo_original>
// kernel: tpu_custom_call.1
$region0: #{tpu_custom_call.1}
  #allocation0 [shape = 'u32[]', space=smem, size = 0x4, offset = 0x4, fixed_abs, tag = 'smem constant byte address 0x4 - core index']
  #allocation1 [shape = 'u32[144,128]{1,0:T(1,128)}', space=vmem, size = 0x12000, scoped, tag = 'internal scratch']
  %s0 = inlined_call_operand.hbm [shape: f32[8,8,32], index: 0, kind: input, shape index: {}]
  %s1 = inlined_call_operand.hbm [shape: f32[8,8,8], index: 1, kind: output, shape index: {}]
  %s2 = sld [smem:[#allocation0]]
  $region41: #{tpu_custom_call.1} parent=0
    _
  %s4 = ssub.s32 1, %s2
  %s5 = scalar_select 0, %s4, %s2
  $region1: #{tpu_custom_call.1} parent=0
    #allocation2 [shape = 'u8[32768]{0}', space=vmem, size = 0x8000, scoped, tag = 'input window, operand 0']
    #allocation3 [shape = 's32[2]{0}', space=sflag, size = 0x8, scoped, tag = 'scoped memory for tpu_custom_call.1']
    #allocation4 [shape = 's32[2]{0}', space=sflag, size = 0x8, scoped, tag = 'scoped memory for tpu_custom_call.1']
    #allocation5 [shape = 'u8[32768]{0}', space=vmem, size = 0x8000, scoped, tag = 'output window, operand 0']
    %6 = vsyncpa [#allocation3], 0
    %s7 = scalar_lea.sflag [#allocation3], 1
    %8 = vsyncpa %s7, 0
    %9 = vsyncpa [#allocation4], 0
    %s10 = scalar_lea.sflag [#allocation4], 1
    %11 = vsyncpa %s10, 0
    loop: start=0, step=1, limit=4
    $region2: #{tpu_custom_call.1} parent=1 // loop_pre_header
      _
    $region3: #{tpu_custom_call.1} parent=1 // loop_header
      %s13 = sphi 0, %s17
      %p14 = scmp.ge.s32.totalorder %s13, 4
      %s20 = sphi 0, %s32
      %s21 = sphi 0, %s28
      %s22 = sphi 0, %s20
      %s23 = sphi 0, %s21
      %s24 = sphi 0, %s22
      %s25 = sphi 0, %s23
      %s37 = sphi 0, %s39
      %s40 = sphi 0, %s37
      %s41 = sphi 0, %s40
      %s57 = sphi 0, %s41
      %s65 = sphi 0, %s67
      %s68 = sphi 0, %s65
      %s69 = sphi 0, %s68
      %s85 = sphi 0, %s69
    $region4: #{tpu_custom_call.1} parent=1 // loop_header_branch
      %16 = sbr.rel (%p14) target = $region8
    $region5: #{tpu_custom_call.1} parent=1 // loop_body
      %s18 = ssub.s32 %s13, 1
      %s19 = ssub.s32 %s13, 2
      %s26 = sadd.s32 1, %s21
      %p27 = scmp.ge.s32.totalorder %s26, 1
      %s28 = scalar_select %p27, 0, %s26
      %s29 = sadd.s32 1, %s20
      %s30 = scalar_select %p27, %s29, %s20
      %p31 = scmp.ge.s32.totalorder %s30, 2
      %s32 = scalar_select %p31, 0, %s30
      %s33 = ssub.s32 %s20, %s32
      %s34 = ssub.s32 %s21, %s28
      %s35 = sor.u32 %s33, %s34
      %p36 = scmp.eq.s32.totalorder %s35, 0
      %s38 = sadd.s32 %s37, 1
      %s39 = scalar_select %p36, %s37, %s38
      %p42 = pneg %p36
      %p43 = scmp.eq.s32.totalorder %s13, 1
      %p44 = por %p42, %p43
      %p45 = scmp.ne.s32.totalorder %s37, %s40
      %p46 = scmp.eq.s32.totalorder %s13, 0
      %p47 = por %p45, %p46
      %p48 = scmp.ne.s32.totalorder %s37, %s40
      %p49 = scmp.eq.s32.totalorder %s18, 1
      %p50 = por %p48, %p49
      %p51 = scmp.ne.s32.totalorder %s40, %s41
      %p52 = scmp.eq.s32.totalorder %s18, 0
      %p53 = por %p51, %p52
      %p54 = scmp.ne.s32.totalorder %s40, %s41
      %p55 = scmp.eq.s32.totalorder %s19, 1
      %p56 = por %p54, %p55
      %p58 = scmp.ne.s32.totalorder %s41, %s57
      %p59 = scmp.eq.s32.totalorder %s19, 0
      %p60 = por %p58, %p59
      %s61 = ssub.s32 %s20, %s32
      %s62 = ssub.s32 %s21, %s28
      %s63 = sor.u32 %s61, %s62
      %p64 = scmp.eq.s32.totalorder %s63, 0
      %s66 = sadd.s32 %s65, 1
      %s67 = scalar_select %p64, %s65, %s66
      %p70 = pneg %p64
      %p71 = scmp.eq.s32.totalorder %s13, 1
      %p72 = por %p70, %p71
      %p73 = scmp.ne.s32.totalorder %s65, %s68
      %p74 = scmp.eq.s32.totalorder %s13, 0
      %p75 = por %p73, %p74
      %p76 = scmp.ne.s32.totalorder %s65, %s68
      %p77 = scmp.eq.s32.totalorder %s18, 1
      %p78 = por %p76, %p77
      %p79 = scmp.ne.s32.totalorder %s68, %s69
      %p80 = scmp.eq.s32.totalorder %s18, 0
      %p81 = por %p79, %p80
      %p82 = scmp.ne.s32.totalorder %s68, %s69
      %p83 = scmp.eq.s32.totalorder %s19, 1
      %p84 = por %p82, %p83
      %p86 = scmp.ne.s32.totalorder %s69, %s85
      %p87 = scmp.eq.s32.totalorder %s19, 0
      %p88 = por %p86, %p87
      %p89 = scmp.le.s32.totalorder 1, %s13
      %p90 = scmp.lt.s32.totalorder %s13, 3
      %p91 = pnand %p89, %p90
      %p92 = pneg %p91
      // Predicated region
      $region9: #{tpu_custom_call.1} parent=5 // pred_check
        _
      $region10: #{tpu_custom_call.1} parent=5 // pred_check_branch
        %94 = sbr.rel (%p91) target = $region12
      $region11: #{tpu_custom_call.1} parent=5 // pred_region
        %s95 = ssub.s32 %s13, 1
      $region12: #{tpu_custom_call.1} parent=5 // pred_fallthru
        _
      %p96 = scmp.lt.s32.totalorder %s13, 2
      // Predicated region
      $region13: #{tpu_custom_call.1} parent=5 // pred_check
        %p97 = pneg %p96
      $region14: #{tpu_custom_call.1} parent=5 // pred_check_branch
        %99 = sbr.rel (%p97) target = $region16
      $region15: #{tpu_custom_call.1} parent=5 // pred_region
        // Predicated region
        $region17: #{tpu_custom_call.1} parent=15 // pred_check
          %p100 = pneg %p47
        $region18: #{tpu_custom_call.1} parent=15 // pred_check_branch
          %102 = sbr.rel (%p100) target = $region20
        $region19: #{tpu_custom_call.1} parent=15 // pred_region
          %s103 = sand.u32 %s37, 1
          %s104 = scalar_lea.sflag [#allocation3], %s103
          %s105 = sand.u32 %s37, 1
          %s106 = smul.addr %s105, 32
          %s107 = scalar_lea.vmem [#allocation2], %s106
          %s108 = smul.u32 4, %s20
          %s110 = ssub.s32 512, 512
          %111 = vsyncadd %s104, %s110
          %s112 = sadd.s32 %s21, %s108
          %s113 = smul.addr %s112, 128
          %s114 = scalar_lea.hbm %s0, %s113
          %s115 = sshll.u32 %s107, 4
          %s116 = int_to_ptr.vmem [resolvable:$true] %s115
          %121 = dma.hbm_to_vmem [thread:$0]  %s114, 512, %s116, %s104, 128, 128, 8
        $region20: #{tpu_custom_call.1} parent=15 // pred_fallthru
          _
      $region16: #{tpu_custom_call.1} parent=5 // pred_fallthru
        _
      %p122 = scmp.le.s32.totalorder 1, %s13
      %p123 = scmp.lt.s32.totalorder %s13, 3
      %p124 = pnand %p122, %p123
      %p125 = pneg %p124
      // Predicated region
      $region21: #{tpu_custom_call.1} parent=5 // pred_check
        _
      $region22: #{tpu_custom_call.1} parent=5 // pred_check_branch
        %127 = sbr.rel (%p124) target = $region24
      $region23: #{tpu_custom_call.1} parent=5 // pred_region
        %s128 = ssub.s32 %s13, 1
        %s129 = sand.u32 %s40, 1
        %s130 = scalar_lea.sflag [#allocation3], %s129
        %s131 = sand.u32 %s40, 1
        %s132 = smul.addr %s131, 32
        %s133 = scalar_lea.vmem [#allocation2], %s132
        // Predicated region
        $region25: #{tpu_custom_call.1} parent=23 // pred_check
          %p134 = pneg %p53
        $region26: #{tpu_custom_call.1} parent=23 // pred_check_branch
          %136 = sbr.rel (%p134) target = $region28
        $region27: #{tpu_custom_call.1} parent=23 // pred_region
          %137 = dma.done %s130, 512
        $region28: #{tpu_custom_call.1} parent=23 // pred_fallthru
          _
        %s138 = sand.u32 %s40, 1
        %s139 = scalar_lea.sflag [#allocation3], %s138
        %s140 = sand.u32 %s40, 1
        %s141 = smul.addr %s140, 32
        %s142 = scalar_lea.vmem [#allocation2], %s141
        %p143 = pneg %p53
        %p144 = pneg %p50
        %p145 = pneg %p81
        %p146 = pneg %p78
        %s147 = sand.u32 %s68, 1
        %s148 = scalar_lea.sflag [#allocation4], %s147
        %s149 = sand.u32 %s68, 1
        %s150 = smul.addr %s149, 32
        %s151 = scalar_lea.vmem [#allocation5], %s150
        %s152 = smul.u32 4, %s22
        %s153 = smul.u32 4, %s22
        %v154 = vld [vmem:[%s133] sm:$0xff]
        %v155 = vld [vmem:[%s133 + $0x8] sm:$0xff]
        %v156 = vld [vmem:[%s133 + $0x10] sm:$0xff]
        %v157 = vld [vmem:[%s133 + $0x18] sm:$0xff]
        %162 = vrot.lane.b32.xlu0 %v154, 112
        %v163 = vpop.permute.xlu0 %162
        %164 = vrot.lane.b32.xlu0 %v155, 112
        %v165 = vpop.permute.xlu0 %164
        %166 = vrot.lane.b32.xlu0 %v156, 112
        %v167 = vpop.permute.xlu0 %166
        %168 = vrot.lane.b32.xlu0 %v157, 112
        %v169 = vpop.permute.xlu0 %168
        %v174 = vmax.f32 %v154, %v163
        %v175 = vmax.f32 %v155, %v165
        %v176 = vmax.f32 %v156, %v167
        %v177 = vmax.f32 %v157, %v169
        %v178 = vlaneseq
        %v179 = vand.u32 %v178, 127
        %v180 = vmul.u32 %v179, 2
        %vm181 = vcmp.lt.s32.totalorder %v180, 0
        %v182 = vadd.s32 %v180, 16
        %v183 = vsel %vm181, %v182, %v180
        %184 = vset.pattern.permute.xlu0 %v183
        %185 = vperm.xlu0 %184, %v174
        %v186 = vpop.permute.xlu0 %185
        %187 = vset.pattern.permute.xlu0 %v183
        %188 = vperm.xlu0 %187, %v175
        %v189 = vpop.permute.xlu0 %188
        %190 = vset.pattern.permute.xlu0 %v183
        %191 = vperm.xlu0 %190, %v176
        %v192 = vpop.permute.xlu0 %191
        %193 = vset.pattern.permute.xlu0 %v183
        %194 = vperm.xlu0 %193, %v177
        %v195 = vpop.permute.xlu0 %194
        %v196 = vadd.s32 %v180, 1
        %vm197 = vcmp.lt.s32.totalorder %v196, 0
        %v198 = vadd.s32 %v196, 16
        %v199 = vsel %vm197, %v198, %v196
        %200 = vset.pattern.permute.xlu0 %v199
        %201 = vperm.xlu0 %200, %v174
        %v202 = vpop.permute.xlu0 %201
        %203 = vset.pattern.permute.xlu0 %v199
        %204 = vperm.xlu0 %203, %v175
        %v205 = vpop.permute.xlu0 %204
        %206 = vset.pattern.permute.xlu0 %v199
        %207 = vperm.xlu0 %206, %v176
        %v208 = vpop.permute.xlu0 %207
        %209 = vset.pattern.permute.xlu0 %v199
        %210 = vperm.xlu0 %209, %v177
        %v211 = vpop.permute.xlu0 %210
        %v212 = vmax.f32 %v186, %v202
        %v213 = vmax.f32 %v189, %v205
        %v214 = vmax.f32 %v192, %v208
        %v215 = vmax.f32 %v195, %v211
        %vm216 = vcmask 64512
        %217 = vst.msk [vmem:[%s151] sm:$0xff] %vm216, %v212
        %218 = vst.msk [vmem:[%s151 + $0x8] sm:$0xff] %vm216, %v213
        %219 = vst.msk [vmem:[%s151 + $0x10] sm:$0xff] %vm216, %v214
        %220 = vst.msk [vmem:[%s151 + $0x18] sm:$0xff] %vm216, %v215
        %s221 = sand.u32 %s68, 1
        %s222 = scalar_lea.sflag [#allocation4], %s221
        %s223 = sand.u32 %s68, 1
        %s224 = smul.addr %s223, 32
        %s225 = scalar_lea.vmem [#allocation5], %s224
        // Predicated region
        $region29: #{tpu_custom_call.1} parent=23 // pred_check
          %p226 = pneg %p78
        $region30: #{tpu_custom_call.1} parent=23 // pred_check_branch
          %228 = sbr.rel (%p226) target = $region32
        $region31: #{tpu_custom_call.1} parent=23 // pred_region
          %s229 = smul.u32 4, %s22
          %s231 = ssub.s32 512, 512
          %232 = vsyncadd %s222, %s231
          %s233 = sadd.s32 %s23, %s229
          %s234 = smul.addr %s233, 128
          %s235 = scalar_lea.hbm %s1, %s234
          %s236 = sshll.u32 %s225, 4
          %s237 = int_to_ptr.vmem [resolvable:$true] %s236
          %242 = dma.vmem_to_hbm [thread:$0]  %s237, 512, %s235, %s222, 128, 128, 8
        $region32: #{tpu_custom_call.1} parent=23 // pred_fallthru
          _
      $region24: #{tpu_custom_call.1} parent=5 // pred_fallthru
        _
      %p243 = scmp.le.s32.totalorder 2, %s13
      // Predicated region
      $region33: #{tpu_custom_call.1} parent=5 // pred_check
        %p244 = pneg %p243
      $region34: #{tpu_custom_call.1} parent=5 // pred_check_branch
        %246 = sbr.rel (%p244) target = $region36
      $region35: #{tpu_custom_call.1} parent=5 // pred_region
        %s247 = ssub.s32 %s13, 2
        // Predicated region
        $region37: #{tpu_custom_call.1} parent=35 // pred_check
          %p248 = pneg %p84
        $region38: #{tpu_custom_call.1} parent=35 // pred_check_branch
          %250 = sbr.rel (%p248) target = $region40
        $region39: #{tpu_custom_call.1} parent=35 // pred_region
          %s251 = sand.u32 %s69, 1
          %s252 = scalar_lea.sflag [#allocation4], %s251
          %s253 = sand.u32 %s69, 1
          %s254 = smul.addr %s253, 32
          %s255 = scalar_lea.vmem [#allocation5], %s254
          %256 = dma.done %s252, 512
        $region40: #{tpu_custom_call.1} parent=35 // pred_fallthru
          _
      $region36: #{tpu_custom_call.1} parent=5 // pred_fallthru
        _
    $region6: #{tpu_custom_call.1} parent=1 // loop_footer
      %s17 = sadd.s32 1, %s13
    $region7: #{tpu_custom_call.1} parent=1 // loop_footer_branch
      %12 = sbr.rel target = $region3
    $region8: #{tpu_custom_call.1} parent=1 // loop_exit
      _
    %257 = vsyncpa [#allocation3], 1
    %s258 = scalar_lea.sflag [#allocation3], 1
    %259 = vsyncpa %s258, 1
    %260 = vsyncpa [#allocation4], 1
    %s261 = scalar_lea.sflag [#allocation4], 1
    %262 = vsyncpa %s261, 1

</llo_original>
